<compile_context>
chip_gen: v5e
topology: v5e:2x2
jax: 0.10.0
libtpu: 0.0.40
codegen_flags: <defaults>
</compile_context>

<pallas_src>
import functools

import jax
import jax.numpy as jnp
import numpy as np
from jax.experimental import pallas as pl
from jax.experimental.pallas import tpu as pltpu

# Model sizes (GATConv(in_feats=32, out_feats=16, num_heads=2))
N = 128            # number of nodes
F_IN = 32          # input feature dim
H = 2              # num heads
D = 16             # out_feats per head
HD = H * D
K_PAD = 40         # F_IN + 1 (ones column), padded up to a multiple of 8
NCOL = 2 * HD + 1 + H   # packed columns: [feat | res+bias | ones | er_h]  -> 67
NEG_SLOPE = 0.2    # LeakyReLU negative slope


def gat_kernel(xs_ref, mask_ref, wm_ref, el_ref, out_ref, *, td):
    """One dst-row tile of the GATConv forward.

    xs_ref   : (N, K_PAD)     all src rows of [x | 1 | 0-pad]   (grid-invariant)
    mask_ref : (td, N)        additive softmax mask, bf16: 0 where edge, -1e30 elsewhere
    wm_ref   : (K_PAD, NCOL)  packed weights: [0:HD)=fc, [HD:2HD)=res_fc(+bias row),
                              [2HD]=ones col, [2HD+1:)=w@attn_r (per-head er)
    el_ref   : (H, N)         precomputed per-src el scores (row-oriented), f32
    out_ref  : (td, HD)
    """
    # TODO(synk): feat_drop / attn_drop are identity here (inference semantics).
    n_tiles = N // td

    # Single fused projection for ALL nodes: feat | res+bias | ones | er — one MXU pass.
    fr_src = jnp.dot(xs_ref[...], wm_ref[...],
                     preferred_element_type=jnp.float32)               # (N, NCOL)

    # dst rows of this tile are a sublane-aligned row-slice of fr_src (no 2nd matmul).
    if n_tiles == 1:
        fr_dst = fr_src
    else:
        i = pl.program_id(0)
        fr_dst = fr_src[0:td]
        for t in range(1, n_tiles):
            sel = (i == t).astype(jnp.float32)
            fr_dst = fr_dst * (1.0 - sel) + fr_src[t * td:(t + 1) * td] * sel

    fr_src_bf = fr_src.astype(jnp.bfloat16)     # aggregation operand (feat + ones cols)
    mask = mask_ref[...]                        # (td, N) bf16 additive mask
    el_all = el_ref[...]                        # (H, N)  f32

    # Per-head attention logits -> softmax numerators, stacked along sublanes so the
    # aggregation for BOTH heads is a single bf16 MXU matmul.
    p_heads = []
    for h in range(H):                                         # static unroll over heads
        er = fr_dst[:, 2 * HD + 1 + h:2 * HD + 2 + h]          # (td, 1)  per-dst
        e = er + el_all[h:h + 1, :]                            # (td, N)  u_add_v
        e = jnp.where(e > 0, e, NEG_SLOPE * e) + mask          # LeakyReLU + mask (f32)
        m = jnp.max(e, axis=-1, keepdims=True)                 # (td, 1)
        p_heads.append(jnp.exp(e - m).astype(jnp.bfloat16))    # masked entries -> 0
    p = jnp.concatenate(p_heads, axis=0)                       # (H*td, N) bf16

    # Unnormalized aggregation + softmax denominators for both heads in ONE MXU pass.
    agg = jnp.dot(p, fr_src_bf, preferred_element_type=jnp.float32)     # (H*td, NCOL)
    inv = pl.reciprocal(agg[:, 2 * HD:2 * HD + 1], approx=True)         # (H*td, 1)  [EUP]

    # Lane-select each head's output columns into one (td, HD) slab; single store.
    lane = jax.lax.broadcasted_iota(jnp.int32, (td, HD), 1)
    rst = agg[0:td, 0:HD] * inv[0:td]
    for h in range(1, H):
        rst = jnp.where(lane >= h * D,
                        agg[h * td:(h + 1) * td, 0:HD] * inv[h * td:(h + 1) * td],
                        rst)
    res = fr_dst[:, HD:2 * HD]                                 # (td, HD) residual + bias
    out_ref[...] = (rst + res).astype(out_ref.dtype)


def pack_params(w, wres, attn_l, attn_r, bias):
    """Host-side (numpy/f64) parameter packing into the fused weight matrices."""
    w64 = np.asarray(w, np.float64)                      # (F_IN, HD)
    wres64 = np.asarray(wres, np.float64)                # (F_IN, HD)
    al = np.asarray(attn_l, np.float64)                  # (H, D)
    ar = np.asarray(attn_r, np.float64)                  # (H, D)
    b = np.asarray(bias, np.float64).reshape(HD)

    w_el = np.zeros((F_IN, H), np.float64)
    w_er = np.zeros((F_IN, H), np.float64)
    for h in range(H):
        w_el[:, h] = w64[:, h * D:(h + 1) * D] @ al[h]   # el_h = x @ w_el[:, h]
        w_er[:, h] = w64[:, h * D:(h + 1) * D] @ ar[h]   # er_h = x @ w_er[:, h]

    wm = np.zeros((K_PAD, NCOL), np.float64)
    wm[:F_IN, :HD] = w64                                 # feat = x @ w
    wm[:F_IN, HD:2 * HD] = wres64                        # res  = x @ wres + bias
    wm[F_IN, HD:2 * HD] = b                              #   (bias via the ones column)
    wm[F_IN, 2 * HD] = 1.0                               # ones column -> softmax denom
    wm[:F_IN, 2 * HD + 1:] = w_er                        # er columns
    return jnp.asarray(wm, jnp.float32), jnp.asarray(w_el, jnp.float32)


def gat_forward(x, adj, w_main, w_el):
    # Grid shaping per chip generation: v7x (2 TensorCores) -> 2 "parallel" 64-row
    # tiles; single-TC v5e/v6e -> one 128-row step (no per-step overhead, no
    # recomputed grid-invariant projection).
    kind = jax.devices()[0].device_kind.lower()
    td = 64 if "7" in kind else 128
    n_tiles = N // td

    ones = jnp.ones((N, 1), jnp.float32)
    zpad = jnp.zeros((N, K_PAD - F_IN - 1), jnp.float32)
    x_aug = jnp.concatenate([x, ones, zpad], axis=1)       # (N, K_PAD)
    el_rows = (x @ w_el).T.astype(jnp.float32)             # (H, N) hoisted out of kernel
    mask_add = ((adj - 1.0) * 1e30).astype(jnp.bfloat16)   # 0 where edge, -1e30 elsewhere

    out = pl.pallas_call(
        functools.partial(gat_kernel, td=td),
        grid=(n_tiles,),
        in_specs=[
            pl.BlockSpec((N, K_PAD), lambda i: (0, 0)),      # x_aug, all src rows
            pl.BlockSpec((td, N), lambda i: (i, 0)),         # additive mask rows (bf16)
            pl.BlockSpec((K_PAD, NCOL), lambda i: (0, 0)),   # packed fc/res/bias/attn_r
            pl.BlockSpec((H, N), lambda i: (0, 0)),          # precomputed el rows
        ],
        out_specs=pl.BlockSpec((td, HD), lambda i: (i, 0)),
        out_shape=jax.ShapeDtypeStruct((N, HD), jnp.float32),
        compiler_params=pltpu.CompilerParams(
            dimension_semantics=("parallel",) if n_tiles > 1 else ("arbitrary",)),
    )(x_aug, mask_add, w_main, el_rows)
    return out.reshape(N, H, D)


def reference(x, adj, w, wres, al, ar, b):
    """Pure-JAX (f32) reference mirroring the DGL GATConv forward semantics."""
    feat = (x @ w).reshape(N, H, D)
    el = (feat * al.reshape(1, H, D)).sum(-1)            # (N, H)
    er = (feat * ar.reshape(1, H, D)).sum(-1)            # (N, H)
    e = er[:, None, :] + el[None, :, :]                  # (dst, src, H)
    e = jnp.where(e > 0, e, NEG_SLOPE * e)
    e = jnp.where(adj[:, :, None] > 0, e, -jnp.inf)
    a = jax.nn.softmax(e, axis=1)
    a = jnp.where(adj[:, :, None] > 0, a, 0.0)
    rst = jnp.einsum("ijh,jhd->ihd", a, feat)            # (dst, H, D)
    res = (x @ wres).reshape(N, H, D)
    return rst + res + b.reshape(1, H, D)


def xavier_normal(key, shape, fan_in, fan_out, gain):
    std = gain * (2.0 / (fan_in + fan_out)) ** 0.5
    return std * jax.random.normal(key, shape, dtype=jnp.float32)


if __name__ == "__main__":
    key = jax.random.PRNGKey(0)
    kx, kadj, kw, kwres, kal, kar = jax.random.split(key, 6)
    gain = float(np.sqrt(2.0))  # nn.init.calculate_gain('relu')

    # Node features and a random dense adjacency; self-loops guarantee in-degree >= 1.
    x = jax.random.normal(kx, (N, F_IN), dtype=jnp.float32)
    adj = (jax.random.uniform(kadj, (N, N)) < 0.15).astype(jnp.float32)
    adj = jnp.maximum(adj, jnp.eye(N, dtype=jnp.float32))

    # Parameters (shapes from GATConv.__init__; fc weights stored transposed).
    w = xavier_normal(kw, (F_IN, HD), F_IN, HD, gain)        # fc
    wres = xavier_normal(kwres, (F_IN, HD), F_IN, HD, gain)  # res_fc (in != out -> Linear)
    attn_l = xavier_normal(kal, (H, D), D, D, gain)
    attn_r = xavier_normal(kar, (H, D), D, D, gain)
    bias = jnp.zeros((HD,), dtype=jnp.float32)               # nn.init.constant_(bias, 0)

    w_main, w_el = pack_params(w, wres, attn_l, attn_r, bias)

    out = gat_forward(x, adj, w_main, w_el)
    out = jax.block_until_ready(out)

    ref = reference(x, adj, w, wres, attn_l, attn_r, bias)
    # Tolerance reflects the bf16 aggregation matmul (f32 accumulation) and the
    # approximate EUP reciprocal used for the softmax denominator.
    np.testing.assert_allclose(np.asarray(out), np.asarray(ref), rtol=2e-2, atol=3e-2)
    print("KERNEL_OK")
</pallas_src>

<mosaic_0001>
module attributes {stable_mosaic.version = 11 : i64} {
  func.func @gat_kernel(%arg0: i32, %arg1: memref<128x40xf32, #tpu.memory_space<vmem>>, %arg2: memref<128x128xbf16, #tpu.memory_space<vmem>>, %arg3: memref<40x67xf32, #tpu.memory_space<vmem>>, %arg4: memref<2x128xf32, #tpu.memory_space<vmem>>, %arg5: memref<128x32xf32, #tpu.memory_space<vmem>>) attributes {dimension_semantics = [#tpu.dimension_semantics<arbitrary>], iteration_bounds = array<i64: 1>, scalar_prefetch = 0 : i64, scratch_operands = 0 : i64, tpu.core_type = #tpu.core_type<tc>, window_params = [{pipeline_mode = #tpu.pipeline_mode<synchronous>, transform_indices = @transform_0, window_bounds = array<i64: 128, 40>}, {transform_indices = @transform_1, window_bounds = array<i64: 128, 128>}, {pipeline_mode = #tpu.pipeline_mode<synchronous>, transform_indices = @transform_2, window_bounds = array<i64: 40, 67>}, {pipeline_mode = #tpu.pipeline_mode<synchronous>, transform_indices = @transform_3, window_bounds = array<i64: 2, 128>}, {transform_indices = @transform_4, window_bounds = array<i64: 128, 32>}]} {
    %c0 = arith.constant 0 : index
    %c0_0 = arith.constant 0 : index
    %0 = vector.load %arg1[%c0, %c0_0] : memref<128x40xf32, #tpu.memory_space<vmem>>, vector<128x40xf32>
    %c0_1 = arith.constant 0 : index
    %c0_2 = arith.constant 0 : index
    %1 = vector.load %arg3[%c0_1, %c0_2] : memref<40x67xf32, #tpu.memory_space<vmem>>, vector<40x67xf32>
    %cst = arith.constant dense<0.000000e+00> : vector<128x67xf32>
    %2 = tpu.matmul %0, %1, %cst {dimension_numbers = #tpu.dot_dimension_numbers<[1], [0], [0], [1], [0, 0, 1, 1], [], []>} : vector<128x40xf32>, vector<40x67xf32>, vector<128x67xf32> -> vector<128x67xf32>
    %3 = arith.truncf %2 : vector<128x67xf32> to vector<128x67xbf16>
    %c0_3 = arith.constant 0 : index
    %c0_4 = arith.constant 0 : index
    %4 = vector.load %arg2[%c0_3, %c0_4] : memref<128x128xbf16, #tpu.memory_space<vmem>>, vector<128x128xbf16>
    %c0_5 = arith.constant 0 : index
    %c0_6 = arith.constant 0 : index
    %5 = vector.load %arg4[%c0_5, %c0_6] : memref<2x128xf32, #tpu.memory_space<vmem>>, vector<2x128xf32>
    %6 = vector.extract_strided_slice %2 {offsets = [0, 65], sizes = [128, 1], strides = [1, 1]} : vector<128x67xf32> to vector<128x1xf32>
    %7 = vector.extract_strided_slice %5 {offsets = [0, 0], sizes = [1, 128], strides = [1, 1]} : vector<2x128xf32> to vector<1x128xf32>
    %8 = vector.broadcast %6 : vector<128x1xf32> to vector<128x128xf32>
    %9 = vector.broadcast %7 : vector<1x128xf32> to vector<128x128xf32>
    %10 = arith.addf %8, %9 : vector<128x128xf32>
    %cst_7 = arith.constant 0.000000e+00 : f32
    %11 = vector.broadcast %cst_7 : f32 to vector<128x128xf32>
    %12 = arith.cmpf ogt, %10, %11 : vector<128x128xf32>
    %cst_8 = arith.constant 2.000000e-01 : f32
    %13 = vector.broadcast %cst_8 : f32 to vector<128x128xf32>
    %14 = arith.mulf %13, %10 : vector<128x128xf32>
    %15 = arith.select %12, %10, %14 : vector<128x128xi1>, vector<128x128xf32>
    %16 = arith.extf %4 : vector<128x128xbf16> to vector<128x128xf32>
    %17 = arith.addf %15, %16 : vector<128x128xf32>
    %cst_9 = arith.constant dense<0xFF800000> : vector<128xf32>
    %18 = vector.multi_reduction <maximumf>, %17, %cst_9 [1] : vector<128x128xf32> to vector<128xf32>
    %19 = vector.shape_cast %18 : vector<128xf32> to vector<128x1xf32>
    %20 = vector.broadcast %19 : vector<128x1xf32> to vector<128x128xf32>
    %21 = arith.subf %17, %20 : vector<128x128xf32>
    %22 = math.exp %21 : vector<128x128xf32>
    %23 = arith.truncf %22 : vector<128x128xf32> to vector<128x128xbf16>
    %24 = vector.extract_strided_slice %2 {offsets = [0, 66], sizes = [128, 1], strides = [1, 1]} : vector<128x67xf32> to vector<128x1xf32>
    %25 = vector.extract_strided_slice %5 {offsets = [1, 0], sizes = [1, 128], strides = [1, 1]} : vector<2x128xf32> to vector<1x128xf32>
    %26 = vector.broadcast %24 : vector<128x1xf32> to vector<128x128xf32>
    %27 = vector.broadcast %25 : vector<1x128xf32> to vector<128x128xf32>
    %28 = arith.addf %26, %27 : vector<128x128xf32>
    %cst_10 = arith.constant 0.000000e+00 : f32
    %29 = vector.broadcast %cst_10 : f32 to vector<128x128xf32>
    %30 = arith.cmpf ogt, %28, %29 : vector<128x128xf32>
    %cst_11 = arith.constant 2.000000e-01 : f32
    %31 = vector.broadcast %cst_11 : f32 to vector<128x128xf32>
    %32 = arith.mulf %31, %28 : vector<128x128xf32>
    %33 = arith.select %30, %28, %32 : vector<128x128xi1>, vector<128x128xf32>
    %34 = arith.extf %4 : vector<128x128xbf16> to vector<128x128xf32>
    %35 = arith.addf %33, %34 : vector<128x128xf32>
    %cst_12 = arith.constant dense<0xFF800000> : vector<128xf32>
    %36 = vector.multi_reduction <maximumf>, %35, %cst_12 [1] : vector<128x128xf32> to vector<128xf32>
    %37 = vector.shape_cast %36 : vector<128xf32> to vector<128x1xf32>
    %38 = vector.broadcast %37 : vector<128x1xf32> to vector<128x128xf32>
    %39 = arith.subf %35, %38 : vector<128x128xf32>
    %40 = math.exp %39 : vector<128x128xf32>
    %41 = arith.truncf %40 : vector<128x128xf32> to vector<128x128xbf16>
    %42 = tpu.concatenate %23, %41 in 0 : vector<128x128xbf16>, vector<128x128xbf16> -> vector<256x128xbf16>
    %cst_13 = arith.constant dense<0.000000e+00> : vector<256x67xf32>
    %43 = tpu.matmul %42, %3, %cst_13 {dimension_numbers = #tpu.dot_dimension_numbers<[1], [0], [0], [1], [0, 0, 1, 1], [], []>} : vector<256x128xbf16>, vector<128x67xbf16>, vector<256x67xf32> -> vector<256x67xf32>
    %44 = vector.extract_strided_slice %43 {offsets = [0, 64], sizes = [256, 1], strides = [1, 1]} : vector<256x67xf32> to vector<256x1xf32>
    %45 = tpu.reciprocal %44 {approx = true} : vector<256x1xf32> -> vector<256x1xf32>
    %46 = tpu.iota {dimensions = array<i32: 1>} : vector<128x32xi32>
    %47 = vector.extract_strided_slice %43 {offsets = [0, 0], sizes = [128, 32], strides = [1, 1]} : vector<256x67xf32> to vector<128x32xf32>
    %48 = vector.extract_strided_slice %45 {offsets = [0, 0], sizes = [128, 1], strides = [1, 1]} : vector<256x1xf32> to vector<128x1xf32>
    %49 = vector.broadcast %48 : vector<128x1xf32> to vector<128x32xf32>
    %50 = arith.mulf %47, %49 : vector<128x32xf32>
    %c16_i32 = arith.constant 16 : i32
    %51 = vector.broadcast %c16_i32 : i32 to vector<128x32xi32>
    %52 = arith.cmpi sge, %46, %51 : vector<128x32xi32>
    %53 = vector.extract_strided_slice %43 {offsets = [128, 0], sizes = [128, 32], strides = [1, 1]} : vector<256x67xf32> to vector<128x32xf32>
    %54 = vector.extract_strided_slice %45 {offsets = [128, 0], sizes = [128, 1], strides = [1, 1]} : vector<256x1xf32> to vector<128x1xf32>
    %55 = vector.broadcast %54 : vector<128x1xf32> to vector<128x32xf32>
    %56 = arith.mulf %53, %55 : vector<128x32xf32>
    %57 = arith.select %52, %56, %50 : vector<128x32xi1>, vector<128x32xf32>
    %58 = vector.extract_strided_slice %2 {offsets = [0, 32], sizes = [128, 32], strides = [1, 1]} : vector<128x67xf32> to vector<128x32xf32>
    %59 = arith.addf %57, %58 : vector<128x32xf32>
    %c0_14 = arith.constant 0 : index
    %c0_15 = arith.constant 0 : index
    %60 = vector.load %arg5[%c0_14, %c0_15] : memref<128x32xf32, #tpu.memory_space<vmem>>, vector<128x32xf32>
    tpu.vector_store %arg5[%c0_14, %c0_15], %59 {strides = array<i32>} : memref<128x32xf32, #tpu.memory_space<vmem>>, vector<128x32xf32>,
    return
  }
  func.func @transform_0(%arg0: i32) -> (i32, i32) {
    %c0_i32 = arith.constant 0 : i32
    %c0_i32_0 = arith.constant 0 : i32
    %c0_i32_1 = arith.constant 0 : i32
    return %c0_i32, %c0_i32_0 : i32, i32
  }
  func.func @transform_1(%arg0: i32) -> (i32, i32) {
    %c0_i32 = arith.constant 0 : i32
    %c0_i32_0 = arith.constant 0 : i32
    return %arg0, %c0_i32 : i32, i32
  }
  func.func @transform_2(%arg0: i32) -> (i32, i32) {
    %c0_i32 = arith.constant 0 : i32
    %c0_i32_0 = arith.constant 0 : i32
    %c0_i32_1 = arith.constant 0 : i32
    return %c0_i32, %c0_i32_0 : i32, i32
  }
  func.func @transform_3(%arg0: i32) -> (i32, i32) {
    %c0_i32 = arith.constant 0 : i32
    %c0_i32_0 = arith.constant 0 : i32
    %c0_i32_1 = arith.constant 0 : i32
    return %c0_i32, %c0_i32_0 : i32, i32
  }
  func.func @transform_4(%arg0: i32) -> (i32, i32) {
    %c0_i32 = arith.constant 0 : i32
    %c0_i32_0 = arith.constant 0 : i32
    return %arg0, %c0_i32 : i32, i32
  }
}

</mosaic_0001>

<llo_original>
// kernel: tpu_custom_call.1
$region0: #{tpu_custom_call.1}
  #allocation0 [shape = 'u32[]', space=smem, size = 0x4, offset = 0x4, fixed_abs, tag = 'smem constant byte address 0x4 - core index']
  #allocation1 [shape = 'u32[72,128]{1,0:T(1,128)}', space=vmem, size = 0x9000, scoped, tag = 'internal scratch']
  %s0 = inlined_call_operand.vmem [shape: f32[128,40], index: 0, kind: input, shape index: {}]
  %s1 = inlined_call_operand.vmem [shape: bf16[128,128], index: 1, kind: input, shape index: {}]
  %s2 = inlined_call_operand.vmem [shape: f32[40,67], index: 2, kind: input, shape index: {}]
  %s3 = inlined_call_operand.vmem [shape: f32[2,128], index: 3, kind: input, shape index: {}]
  %s4 = inlined_call_operand.vmem [shape: f32[128,32], index: 4, kind: output, shape index: {}]
  %s5 = sld [smem:[#allocation0]]
  $region26: #{tpu_custom_call.1} parent=0
    _
  %s7 = ssub.s32 1, %s5
  %s8 = scalar_select 0, %s7, %s5
  // Predicated region
  $region2: #{tpu_custom_call.1} parent=0 // pred_check
    _
  $region3: #{tpu_custom_call.1} parent=0 // pred_check_branch
    %10 = sbr.rel (0) target = $region5
  $region4: #{tpu_custom_call.1} parent=0 // pred_region
    _
  $region5: #{tpu_custom_call.1} parent=0 // pred_fallthru
    _
  // Predicated region
  $region6: #{tpu_custom_call.1} parent=0 // pred_check
    _
  $region7: #{tpu_custom_call.1} parent=0 // pred_check_branch
    %12 = sbr.rel (0) target = $region9
  $region8: #{tpu_custom_call.1} parent=0 // pred_region
    _
  $region9: #{tpu_custom_call.1} parent=0 // pred_fallthru
    _
  // Predicated region
  $region10: #{tpu_custom_call.1} parent=0 // pred_check
    _
  $region11: #{tpu_custom_call.1} parent=0 // pred_check_branch
    %14 = sbr.rel (0) target = $region13
  $region12: #{tpu_custom_call.1} parent=0 // pred_region
    _
  $region13: #{tpu_custom_call.1} parent=0 // pred_fallthru
    _
  // Predicated region
  $region14: #{tpu_custom_call.1} parent=0 // pred_check
    _
  $region15: #{tpu_custom_call.1} parent=0 // pred_check_branch
    %16 = sbr.rel (0) target = $region17
  $region16: #{tpu_custom_call.1} parent=0 // pred_region
    _
  $region17: #{tpu_custom_call.1} parent=0 // pred_fallthru
    _
  %v17 = vld [vmem:[%s0] sm:$0xff]
  %v18 = vld [vmem:[%s0 + $0x8] sm:$0xff]
  %v19 = vld [vmem:[%s0 + $0x10] sm:$0xff]
  %v20 = vld [vmem:[%s0 + $0x18] sm:$0xff]
  %v21 = vld [vmem:[%s0 + $0x20] sm:$0xff]
  %v22 = vld [vmem:[%s0 + $0x28] sm:$0xff]
  %v23 = vld [vmem:[%s0 + $0x30] sm:$0xff]
  %v24 = vld [vmem:[%s0 + $0x38] sm:$0xff]
  %v25 = vld [vmem:[%s0 + $0x40] sm:$0xff]
  %v26 = vld [vmem:[%s0 + $0x48] sm:$0xff]
  %v27 = vld [vmem:[%s0 + $0x50] sm:$0xff]
  %v28 = vld [vmem:[%s0 + $0x58] sm:$0xff]
  %v29 = vld [vmem:[%s0 + $0x60] sm:$0xff]
  %v30 = vld [vmem:[%s0 + $0x68] sm:$0xff]
  %v31 = vld [vmem:[%s0 + $0x70] sm:$0xff]
  %v32 = vld [vmem:[%s0 + $0x78] sm:$0xff]
  %v33 = vld [vmem:[%s2] sm:$0xff]
  %v34 = vld [vmem:[%s2 + $0x8] sm:$0xff]
  %v35 = vld [vmem:[%s2 + $0x10] sm:$0xff]
  %v36 = vld [vmem:[%s2 + $0x18] sm:$0xff]
  %v37 = vld [vmem:[%s2 + $0x20] sm:$0xff]
  %vm38 = vcmask 326656
  %v40 = vsel %vm38, %v17, 0
  %v43 = vsel %vm38, %v18, 0
  %v46 = vsel %vm38, %v19, 0
  %v49 = vsel %vm38, %v20, 0
  %v52 = vsel %vm38, %v21, 0
  %v55 = vsel %vm38, %v22, 0
  %v58 = vsel %vm38, %v23, 0
  %v61 = vsel %vm38, %v24, 0
  %v64 = vsel %vm38, %v25, 0
  %v67 = vsel %vm38, %v26, 0
  %v70 = vsel %vm38, %v27, 0
  %v73 = vsel %vm38, %v28, 0
  %v76 = vsel %vm38, %v29, 0
  %v79 = vsel %vm38, %v30, 0
  %v82 = vsel %vm38, %v31, 0
  %v85 = vsel %vm38, %v32, 0
  %87 = vmatpush.msra.mxu0 0.0
  %88 = vmatpush.msra.mxu0 0.0
  %89 = vmatpush.msra.mxu0 0.0
  %90 = vmatpush.msra.mxu0 0.0
  %91 = vmatpush.msra.mxu0 0.0
  %92 = vmatpush.msra.mxu0 0.0
  %93 = vmatpush.msra.mxu0 0.0
  %94 = vmatpush.msra.mxu0 0.0
  %95 = vmatpush.msra.mxu0 0.0
  %96 = vmatpush.msra.mxu0 0.0
  %97 = vmatpush.msra.mxu0 0.0
  %98 = vmatpush.msra.mxu0 %v37
  %99 = vmatpush.msra.mxu0 %v36
  %100 = vmatpush.msra.mxu0 %v35
  %101 = vmatpush.msra.mxu0 %v34
  %102 = vmatpush.msra.mxu0 %v33
  %103 = vmatmul.f32.gmra.mxu0 %v40
  %v104 = vpop.f32.mrf.mxu0
  %v105 = vadd.f32 0.0, %v104
  %106 = vmatmul.f32.gmra.mxu0 %v43
  %v107 = vpop.f32.mrf.mxu0
  %v108 = vadd.f32 0.0, %v107
  %109 = vmatmul.f32.gmra.mxu0 %v46
  %v110 = vpop.f32.mrf.mxu0
  %v111 = vadd.f32 0.0, %v110
  %112 = vmatmul.f32.gmra.mxu0 %v49
  %v113 = vpop.f32.mrf.mxu0
  %v114 = vadd.f32 0.0, %v113
  %115 = vmatmul.f32.gmra.mxu0 %v52
  %v116 = vpop.f32.mrf.mxu0
  %v117 = vadd.f32 0.0, %v116
  %118 = vmatmul.f32.gmra.mxu0 %v55
  %v119 = vpop.f32.mrf.mxu0
  %v120 = vadd.f32 0.0, %v119
  %121 = vmatmul.f32.gmra.mxu0 %v58
  %v122 = vpop.f32.mrf.mxu0
  %v123 = vadd.f32 0.0, %v122
  %124 = vmatmul.f32.gmra.mxu0 %v61
  %v125 = vpop.f32.mrf.mxu0
  %v126 = vadd.f32 0.0, %v125
  %127 = vmatmul.f32.gmra.mxu0 %v64
  %v128 = vpop.f32.mrf.mxu0
  %v129 = vadd.f32 0.0, %v128
  %130 = vmatmul.f32.gmra.mxu0 %v67
  %v131 = vpop.f32.mrf.mxu0
  %v132 = vadd.f32 0.0, %v131
  %133 = vmatmul.f32.gmra.mxu0 %v70
  %v134 = vpop.f32.mrf.mxu0
  %v135 = vadd.f32 0.0, %v134
  %136 = vmatmul.f32.gmra.mxu0 %v73
  %v137 = vpop.f32.mrf.mxu0
  %v138 = vadd.f32 0.0, %v137
  %139 = vmatmul.f32.gmra.mxu0 %v76
  %v140 = vpop.f32.mrf.mxu0
  %v141 = vadd.f32 0.0, %v140
  %142 = vmatmul.f32.gmra.mxu0 %v79
  %v143 = vpop.f32.mrf.mxu0
  %v144 = vadd.f32 0.0, %v143
  %145 = vmatmul.f32.gmra.mxu0 %v82
  %v146 = vpop.f32.mrf.mxu0
  %v147 = vadd.f32 0.0, %v146
  %148 = vmatmul.f32.gmra.mxu0 %v85
  %v149 = vpop.f32.mrf.mxu0
  %v150 = vadd.f32 0.0, %v149
  %151 = vdwg.mxu0
  %v152 = vpack.c.bf16 %v108, %v105
  %v153 = vpack.c.bf16 %v114, %v111
  %v154 = vpack.c.bf16 %v120, %v117
  %v155 = vpack.c.bf16 %v126, %v123
  %v156 = vpack.c.bf16 %v132, %v129
  %v157 = vpack.c.bf16 %v138, %v135
  %v158 = vpack.c.bf16 %v144, %v141
  %v159 = vpack.c.bf16 %v150, %v147
  %v160 = vld [vmem:[%s1] sm:$0xf]
  %v161 = vld [vmem:[%s1 + $0x4] sm:$0xf]
  %v162 = vld [vmem:[%s1 + $0x8] sm:$0xf]
  %v163 = vld [vmem:[%s1 + $0xc] sm:$0xf]
  %v164 = vld [vmem:[%s1 + $0x10] sm:$0xf]
  %v165 = vld [vmem:[%s1 + $0x14] sm:$0xf]
  %v166 = vld [vmem:[%s1 + $0x18] sm:$0xf]
  %v167 = vld [vmem:[%s1 + $0x1c] sm:$0xf]
  %v168 = vld [vmem:[%s1 + $0x20] sm:$0xf]
  %v169 = vld [vmem:[%s1 + $0x24] sm:$0xf]
  %v170 = vld [vmem:[%s1 + $0x28] sm:$0xf]
  %v171 = vld [vmem:[%s1 + $0x2c] sm:$0xf]
  %v172 = vld [vmem:[%s1 + $0x30] sm:$0xf]
  %v173 = vld [vmem:[%s1 + $0x34] sm:$0xf]
  %v174 = vld [vmem:[%s1 + $0x38] sm:$0xf]
  %v175 = vld [vmem:[%s1 + $0x3c] sm:$0xf]
  %v176 = vld [vmem:[%s3] sm:$0x3]
  %178 = vset.pattern.permute.xlu0 65
  %179 = vperm.xlu0 %178, %v105
  %v180 = vpop.permute.xlu0 %179
  %183 = vset.pattern.permute.xlu0 65
  %184 = vperm.xlu0 %183, %v108
  %v185 = vpop.permute.xlu0 %184
  %188 = vset.pattern.permute.xlu0 65
  %189 = vperm.xlu0 %188, %v111
  %v190 = vpop.permute.xlu0 %189
  %193 = vset.pattern.permute.xlu0 65
  %194 = vperm.xlu0 %193, %v114
  %v195 = vpop.permute.xlu0 %194
  %198 = vset.pattern.permute.xlu0 65
  %199 = vperm.xlu0 %198, %v117
  %v200 = vpop.permute.xlu0 %199
  %203 = vset.pattern.permute.xlu0 65
  %204 = vperm.xlu0 %203, %v120
  %v205 = vpop.permute.xlu0 %204
  %208 = vset.pattern.permute.xlu0 65
  %209 = vperm.xlu0 %208, %v123
  %v210 = vpop.permute.xlu0 %209
  %213 = vset.pattern.permute.xlu0 65
  %214 = vperm.xlu0 %213, %v126
  %v215 = vpop.permute.xlu0 %214
  %218 = vset.pattern.permute.xlu0 65
  %219 = vperm.xlu0 %218, %v129
  %v220 = vpop.permute.xlu0 %219
  %223 = vset.pattern.permute.xlu0 65
  %224 = vperm.xlu0 %223, %v132
  %v225 = vpop.permute.xlu0 %224
  %228 = vset.pattern.permute.xlu0 65
  %229 = vperm.xlu0 %228, %v135
  %v230 = vpop.permute.xlu0 %229
  %233 = vset.pattern.permute.xlu0 65
  %234 = vperm.xlu0 %233, %v138
  %v235 = vpop.permute.xlu0 %234
  %238 = vset.pattern.permute.xlu0 65
  %239 = vperm.xlu0 %238, %v141
  %v240 = vpop.permute.xlu0 %239
  %243 = vset.pattern.permute.xlu0 65
  %244 = vperm.xlu0 %243, %v144
  %v245 = vpop.permute.xlu0 %244
  %248 = vset.pattern.permute.xlu0 65
  %249 = vperm.xlu0 %248, %v147
  %v250 = vpop.permute.xlu0 %249
  %253 = vset.pattern.permute.xlu0 65
  %254 = vperm.xlu0 %253, %v150
  %v255 = vpop.permute.xlu0 %254
  %v257 = vperm.slane %v176, 0
  %v258 = vadd.f32 %v180, %v257
  %v259 = vadd.f32 %v185, %v257
  %v260 = vadd.f32 %v190, %v257
  %v261 = vadd.f32 %v195, %v257
  %v262 = vadd.f32 %v200, %v257
  %v263 = vadd.f32 %v205, %v257
  %v264 = vadd.f32 %v210, %v257
  %v265 = vadd.f32 %v215, %v257
  %v266 = vadd.f32 %v220, %v257
  %v267 = vadd.f32 %v225, %v257
  %v268 = vadd.f32 %v230, %v257
  %v269 = vadd.f32 %v235, %v257
  %v270 = vadd.f32 %v240, %v257
  %v271 = vadd.f32 %v245, %v257
  %v272 = vadd.f32 %v250, %v257
  %v273 = vadd.f32 %v255, %v257
  %vm274 = vcmp.gt.f32.partialorder %v258, 0.0
  %vm275 = vcmp.gt.f32.partialorder %v259, 0.0
  %vm276 = vcmp.gt.f32.partialorder %v260, 0.0
  %vm277 = vcmp.gt.f32.partialorder %v261, 0.0
  %vm278 = vcmp.gt.f32.partialorder %v262, 0.0
  %vm279 = vcmp.gt.f32.partialorder %v263, 0.0
  %vm280 = vcmp.gt.f32.partialorder %v264, 0.0
  %vm281 = vcmp.gt.f32.partialorder %v265, 0.0
  %vm282 = vcmp.gt.f32.partialorder %v266, 0.0
  %vm283 = vcmp.gt.f32.partialorder %v267, 0.0
  %vm284 = vcmp.gt.f32.partialorder %v268, 0.0
  %vm285 = vcmp.gt.f32.partialorder %v269, 0.0
  %vm286 = vcmp.gt.f32.partialorder %v270, 0.0
  %vm287 = vcmp.gt.f32.partialorder %v271, 0.0
  %vm288 = vcmp.gt.f32.partialorder %v272, 0.0
  %vm289 = vcmp.gt.f32.partialorder %v273, 0.0
  %v290 = vmul.f32 %v258, 0.2
  %v291 = vmul.f32 %v259, 0.2
  %v292 = vmul.f32 %v260, 0.2
  %v293 = vmul.f32 %v261, 0.2
  %v294 = vmul.f32 %v262, 0.2
  %v295 = vmul.f32 %v263, 0.2
  %v296 = vmul.f32 %v264, 0.2
  %v297 = vmul.f32 %v265, 0.2
  %v298 = vmul.f32 %v266, 0.2
  %v299 = vmul.f32 %v267, 0.2
  %v300 = vmul.f32 %v268, 0.2
  %v301 = vmul.f32 %v269, 0.2
  %v302 = vmul.f32 %v270, 0.2
  %v303 = vmul.f32 %v271, 0.2
  %v304 = vmul.f32 %v272, 0.2
  %v305 = vmul.f32 %v273, 0.2
  %v306 = vsel %vm274, %v258, %v290
  %v307 = vsel %vm275, %v259, %v291
  %v308 = vsel %vm276, %v260, %v292
  %v309 = vsel %vm277, %v261, %v293
  %v310 = vsel %vm278, %v262, %v294
  %v311 = vsel %vm279, %v263, %v295
  %v312 = vsel %vm280, %v264, %v296
  %v313 = vsel %vm281, %v265, %v297
  %v314 = vsel %vm282, %v266, %v298
  %v315 = vsel %vm283, %v267, %v299
  %v316 = vsel %vm284, %v268, %v300
  %v317 = vsel %vm285, %v269, %v301
  %v318 = vsel %vm286, %v270, %v302
  %v319 = vsel %vm287, %v271, %v303
  %v320 = vsel %vm288, %v272, %v304
  %v321 = vsel %vm289, %v273, %v305
  %v322 = vunpack.c.l.bf16 %v160
  %v323 = vunpack.c.l.bf16 %v161
  %v324 = vunpack.c.l.bf16 %v162
  %v325 = vunpack.c.l.bf16 %v163
  %v326 = vunpack.c.l.bf16 %v164
  %v327 = vunpack.c.l.bf16 %v165
  %v328 = vunpack.c.l.bf16 %v166
  %v329 = vunpack.c.l.bf16 %v167
  %v330 = vunpack.c.l.bf16 %v168
  %v331 = vunpack.c.l.bf16 %v169
  %v332 = vunpack.c.l.bf16 %v170
  %v333 = vunpack.c.l.bf16 %v171
  %v334 = vunpack.c.l.bf16 %v172
  %v335 = vunpack.c.l.bf16 %v173
  %v336 = vunpack.c.l.bf16 %v174
  %v337 = vunpack.c.l.bf16 %v175
  %v338 = vadd.f32 %v306, %v322
  %v339 = vadd.f32 %v307, %v323
  %v340 = vadd.f32 %v308, %v324
  %v341 = vadd.f32 %v309, %v325
  %v342 = vadd.f32 %v310, %v326
  %v343 = vadd.f32 %v311, %v327
  %v344 = vadd.f32 %v312, %v328
  %v345 = vadd.f32 %v313, %v329
  %v346 = vadd.f32 %v314, %v330
  %v347 = vadd.f32 %v315, %v331
  %v348 = vadd.f32 %v316, %v332
  %v349 = vadd.f32 %v317, %v333
  %v350 = vadd.f32 %v318, %v334
  %v351 = vadd.f32 %v319, %v335
  %v352 = vadd.f32 %v320, %v336
  %v353 = vadd.f32 %v321, %v337
  %354 = vmax.xlane.f32.xlu0 %v338
  %v355 = vpop.xlane.xlu0 %354
  %356 = vmax.xlane.f32.xlu0 %v339
  %v357 = vpop.xlane.xlu0 %356
  %358 = vmax.xlane.f32.xlu0 %v340
  %v359 = vpop.xlane.xlu0 %358
  %360 = vmax.xlane.f32.xlu0 %v341
  %v361 = vpop.xlane.xlu0 %360
  %362 = vmax.xlane.f32.xlu0 %v342
  %v363 = vpop.xlane.xlu0 %362
  %364 = vmax.xlane.f32.xlu0 %v343
  %v365 = vpop.xlane.xlu0 %364
  %366 = vmax.xlane.f32.xlu0 %v344
  %v367 = vpop.xlane.xlu0 %366
  %368 = vmax.xlane.f32.xlu0 %v345
  %v369 = vpop.xlane.xlu0 %368
  %370 = vmax.xlane.f32.xlu0 %v346
  %v371 = vpop.xlane.xlu0 %370
  %372 = vmax.xlane.f32.xlu0 %v347
  %v373 = vpop.xlane.xlu0 %372
  %374 = vmax.xlane.f32.xlu0 %v348
  %v375 = vpop.xlane.xlu0 %374
  %376 = vmax.xlane.f32.xlu0 %v349
  %v377 = vpop.xlane.xlu0 %376
  %378 = vmax.xlane.f32.xlu0 %v350
  %v379 = vpop.xlane.xlu0 %378
  %380 = vmax.xlane.f32.xlu0 %v351
  %v381 = vpop.xlane.xlu0 %380
  %382 = vmax.xlane.f32.xlu0 %v352
  %v383 = vpop.xlane.xlu0 %382
  %384 = vmax.xlane.f32.xlu0 %v353
  %v385 = vpop.xlane.xlu0 %384
  %v386 = vsub.f32 %v338, %v355
  %v387 = vsub.f32 %v339, %v357
  %v388 = vsub.f32 %v340, %v359
  %v389 = vsub.f32 %v341, %v361
  %v390 = vsub.f32 %v342, %v363
  %v391 = vsub.f32 %v343, %v365
  %v392 = vsub.f32 %v344, %v367
  %v393 = vsub.f32 %v345, %v369
  %v394 = vsub.f32 %v346, %v371
  %v395 = vsub.f32 %v347, %v373
  %v396 = vsub.f32 %v348, %v375
  %v397 = vsub.f32 %v349, %v377
  %v398 = vsub.f32 %v350, %v379
  %v399 = vsub.f32 %v351, %v381
  %v400 = vsub.f32 %v352, %v383
  %v401 = vsub.f32 %v353, %v385
  %v402 = vmul.f32 %v386, 1.442695
  %v403 = vpow.pop %v402
  %v404 = vmul.f32 %v387, 1.442695
  %v405 = vpow.pop %v404
  %v406 = vmul.f32 %v388, 1.442695
  %v407 = vpow.pop %v406
  %v408 = vmul.f32 %v389, 1.442695
  %v409 = vpow.pop %v408
  %v410 = vmul.f32 %v390, 1.442695
  %v411 = vpow.pop %v410
  %v412 = vmul.f32 %v391, 1.442695
  %v413 = vpow.pop %v412
  %v414 = vmul.f32 %v392, 1.442695
  %v415 = vpow.pop %v414
  %v416 = vmul.f32 %v393, 1.442695
  %v417 = vpow.pop %v416
  %v418 = vmul.f32 %v394, 1.442695
  %v419 = vpow.pop %v418
  %v420 = vmul.f32 %v395, 1.442695
  %v421 = vpow.pop %v420
  %v422 = vmul.f32 %v396, 1.442695
  %v423 = vpow.pop %v422
  %v424 = vmul.f32 %v397, 1.442695
  %v425 = vpow.pop %v424
  %v426 = vmul.f32 %v398, 1.442695
  %v427 = vpow.pop %v426
  %v428 = vmul.f32 %v399, 1.442695
  %v429 = vpow.pop %v428
  %v430 = vmul.f32 %v400, 1.442695
  %v431 = vpow.pop %v430
  %v432 = vmul.f32 %v401, 1.442695
  %v433 = vpow.pop %v432
  %v434 = vpack.c.bf16 %v403, %v403
  %v435 = vpack.c.bf16 %v405, %v405
  %v436 = vpack.c.bf16 %v407, %v407
  %v437 = vpack.c.bf16 %v409, %v409
  %v438 = vpack.c.bf16 %v411, %v411
  %v439 = vpack.c.bf16 %v413, %v413
  %v440 = vpack.c.bf16 %v415, %v415
  %v441 = vpack.c.bf16 %v417, %v417
  %v442 = vpack.c.bf16 %v419, %v419
  %v443 = vpack.c.bf16 %v421, %v421
  %v444 = vpack.c.bf16 %v423, %v423
  %v445 = vpack.c.bf16 %v425, %v425
  %v446 = vpack.c.bf16 %v427, %v427
  %v447 = vpack.c.bf16 %v429, %v429
  %v448 = vpack.c.bf16 %v431, %v431
  %v449 = vpack.c.bf16 %v433, %v433
  %450 = vset.pattern.permute.xlu0 66
  %451 = vperm.xlu0 %450, %v105
  %v452 = vpop.permute.xlu0 %451
  %454 = vset.pattern.permute.xlu0 66
  %455 = vperm.xlu0 %454, %v108
  %v456 = vpop.permute.xlu0 %455
  %458 = vset.pattern.permute.xlu0 66
  %459 = vperm.xlu0 %458, %v111
  %v460 = vpop.permute.xlu0 %459
  %462 = vset.pattern.permute.xlu0 66
  %463 = vperm.xlu0 %462, %v114
  %v464 = vpop.permute.xlu0 %463
  %466 = vset.pattern.permute.xlu0 66
  %467 = vperm.xlu0 %466, %v117
  %v468 = vpop.permute.xlu0 %467
  %470 = vset.pattern.permute.xlu0 66
  %471 = vperm.xlu0 %470, %v120
  %v472 = vpop.permute.xlu0 %471
  %474 = vset.pattern.permute.xlu0 66
  %475 = vperm.xlu0 %474, %v123
  %v476 = vpop.permute.xlu0 %475
  %478 = vset.pattern.permute.xlu0 66
  %479 = vperm.xlu0 %478, %v126
  %v480 = vpop.permute.xlu0 %479
  %482 = vset.pattern.permute.xlu0 66
  %483 = vperm.xlu0 %482, %v129
  %v484 = vpop.permute.xlu0 %483
  %486 = vset.pattern.permute.xlu0 66
  %487 = vperm.xlu0 %486, %v132
  %v488 = vpop.permute.xlu0 %487
  %490 = vset.pattern.permute.xlu0 66
  %491 = vperm.xlu0 %490, %v135
  %v492 = vpop.permute.xlu0 %491
  %494 = vset.pattern.permute.xlu0 66
  %495 = vperm.xlu0 %494, %v138
  %v496 = vpop.permute.xlu0 %495
  %498 = vset.pattern.permute.xlu0 66
  %499 = vperm.xlu0 %498, %v141
  %v500 = vpop.permute.xlu0 %499
  %502 = vset.pattern.permute.xlu0 66
  %503 = vperm.xlu0 %502, %v144
  %v504 = vpop.permute.xlu0 %503
  %506 = vset.pattern.permute.xlu0 66
  %507 = vperm.xlu0 %506, %v147
  %v508 = vpop.permute.xlu0 %507
  %510 = vset.pattern.permute.xlu0 66
  %511 = vperm.xlu0 %510, %v150
  %v512 = vpop.permute.xlu0 %511
  %v514 = vperm.slane %v176, 1
  %v515 = vadd.f32 %v452, %v514
  %v516 = vadd.f32 %v456, %v514
  %v517 = vadd.f32 %v460, %v514
  %v518 = vadd.f32 %v464, %v514
  %v519 = vadd.f32 %v468, %v514
  %v520 = vadd.f32 %v472, %v514
  %v521 = vadd.f32 %v476, %v514
  %v522 = vadd.f32 %v480, %v514
  %v523 = vadd.f32 %v484, %v514
  %v524 = vadd.f32 %v488, %v514
  %v525 = vadd.f32 %v492, %v514
  %v526 = vadd.f32 %v496, %v514
  %v527 = vadd.f32 %v500, %v514
  %v528 = vadd.f32 %v504, %v514
  %v529 = vadd.f32 %v508, %v514
  %v530 = vadd.f32 %v512, %v514
  %vm531 = vcmp.gt.f32.partialorder %v515, 0.0
  %vm532 = vcmp.gt.f32.partialorder %v516, 0.0
  %vm533 = vcmp.gt.f32.partialorder %v517, 0.0
  %vm534 = vcmp.gt.f32.partialorder %v518, 0.0
  %vm535 = vcmp.gt.f32.partialorder %v519, 0.0
  %vm536 = vcmp.gt.f32.partialorder %v520, 0.0
  %vm537 = vcmp.gt.f32.partialorder %v521, 0.0
  %vm538 = vcmp.gt.f32.partialorder %v522, 0.0
  %vm539 = vcmp.gt.f32.partialorder %v523, 0.0
  %vm540 = vcmp.gt.f32.partialorder %v524, 0.0
  %vm541 = vcmp.gt.f32.partialorder %v525, 0.0
  %vm542 = vcmp.gt.f32.partialorder %v526, 0.0
  %vm543 = vcmp.gt.f32.partialorder %v527, 0.0
  %vm544 = vcmp.gt.f32.partialorder %v528, 0.0
  %vm545 = vcmp.gt.f32.partialorder %v529, 0.0
  %vm546 = vcmp.gt.f32.partialorder %v530, 0.0
  %v547 = vmul.f32 %v515, 0.2
  %v548 = vmul.f32 %v516, 0.2
  %v549 = vmul.f32 %v517, 0.2
  %v550 = vmul.f32 %v518, 0.2
  %v551 = vmul.f32 %v519, 0.2
  %v552 = vmul.f32 %v520, 0.2
  %v553 = vmul.f32 %v521, 0.2
  %v554 = vmul.f32 %v522, 0.2
  %v555 = vmul.f32 %v523, 0.2
  %v556 = vmul.f32 %v524, 0.2
  %v557 = vmul.f32 %v525, 0.2
  %v558 = vmul.f32 %v526, 0.2
  %v559 = vmul.f32 %v527, 0.2
  %v560 = vmul.f32 %v528, 0.2
  %v561 = vmul.f32 %v529, 0.2
  %v562 = vmul.f32 %v530, 0.2
  %v563 = vsel %vm531, %v515, %v547
  %v564 = vsel %vm532, %v516, %v548
  %v565 = vsel %vm533, %v517, %v549
  %v566 = vsel %vm534, %v518, %v550
  %v567 = vsel %vm535, %v519, %v551
  %v568 = vsel %vm536, %v520, %v552
  %v569 = vsel %vm537, %v521, %v553
  %v570 = vsel %vm538, %v522, %v554
  %v571 = vsel %vm539, %v523, %v555
  %v572 = vsel %vm540, %v524, %v556
  %v573 = vsel %vm541, %v525, %v557
  %v574 = vsel %vm542, %v526, %v558
  %v575 = vsel %vm543, %v527, %v559
  %v576 = vsel %vm544, %v528, %v560
  %v577 = vsel %vm545, %v529, %v561
  %v578 = vsel %vm546, %v530, %v562
  %v579 = vadd.f32 %v563, %v322
  %v580 = vadd.f32 %v564, %v323
  %v581 = vadd.f32 %v565, %v324
  %v582 = vadd.f32 %v566, %v325
  %v583 = vadd.f32 %v567, %v326
  %v584 = vadd.f32 %v568, %v327
  %v585 = vadd.f32 %v569, %v328
  %v586 = vadd.f32 %v570, %v329
  %v587 = vadd.f32 %v571, %v330
  %v588 = vadd.f32 %v572, %v331
  %v589 = vadd.f32 %v573, %v332
  %v590 = vadd.f32 %v574, %v333
  %v591 = vadd.f32 %v575, %v334
  %v592 = vadd.f32 %v576, %v335
  %v593 = vadd.f32 %v577, %v336
  %v594 = vadd.f32 %v578, %v337
  %595 = vmax.xlane.f32.xlu0 %v579
  %v596 = vpop.xlane.xlu0 %595
  %597 = vmax.xlane.f32.xlu0 %v580
  %v598 = vpop.xlane.xlu0 %597
  %599 = vmax.xlane.f32.xlu0 %v581
  %v600 = vpop.xlane.xlu0 %599
  %601 = vmax.xlane.f32.xlu0 %v582
  %v602 = vpop.xlane.xlu0 %601
  %603 = vmax.xlane.f32.xlu0 %v583
  %v604 = vpop.xlane.xlu0 %603
  %605 = vmax.xlane.f32.xlu0 %v584
  %v606 = vpop.xlane.xlu0 %605
  %607 = vmax.xlane.f32.xlu0 %v585
  %v608 = vpop.xlane.xlu0 %607
  %609 = vmax.xlane.f32.xlu0 %v586
  %v610 = vpop.xlane.xlu0 %609
  %611 = vmax.xlane.f32.xlu0 %v587
  %v612 = vpop.xlane.xlu0 %611
  %613 = vmax.xlane.f32.xlu0 %v588
  %v614 = vpop.xlane.xlu0 %613
  %615 = vmax.xlane.f32.xlu0 %v589
  %v616 = vpop.xlane.xlu0 %615
  %617 = vmax.xlane.f32.xlu0 %v590
  %v618 = vpop.xlane.xlu0 %617
  %619 = vmax.xlane.f32.xlu0 %v591
  %v620 = vpop.xlane.xlu0 %619
  %621 = vmax.xlane.f32.xlu0 %v592
  %v622 = vpop.xlane.xlu0 %621
  %623 = vmax.xlane.f32.xlu0 %v593
  %v624 = vpop.xlane.xlu0 %623
  %625 = vmax.xlane.f32.xlu0 %v594
  %v626 = vpop.xlane.xlu0 %625
  %v627 = vsub.f32 %v579, %v596
  %v628 = vsub.f32 %v580, %v598
  %v629 = vsub.f32 %v581, %v600
  %v630 = vsub.f32 %v582, %v602
  %v631 = vsub.f32 %v583, %v604
  %v632 = vsub.f32 %v584, %v606
  %v633 = vsub.f32 %v585, %v608
  %v634 = vsub.f32 %v586, %v610
  %v635 = vsub.f32 %v587, %v612
  %v636 = vsub.f32 %v588, %v614
  %v637 = vsub.f32 %v589, %v616
  %v638 = vsub.f32 %v590, %v618
  %v639 = vsub.f32 %v591, %v620
  %v640 = vsub.f32 %v592, %v622
  %v641 = vsub.f32 %v593, %v624
  %v642 = vsub.f32 %v594, %v626
  %v643 = vmul.f32 %v627, 1.442695
  %v644 = vpow.pop %v643
  %v645 = vmul.f32 %v628, 1.442695
  %v646 = vpow.pop %v645
  %v647 = vmul.f32 %v629, 1.442695
  %v648 = vpow.pop %v647
  %v649 = vmul.f32 %v630, 1.442695
  %v650 = vpow.pop %v649
  %v651 = vmul.f32 %v631, 1.442695
  %v652 = vpow.pop %v651
  %v653 = vmul.f32 %v632, 1.442695
  %v654 = vpow.pop %v653
  %v655 = vmul.f32 %v633, 1.442695
  %v656 = vpow.pop %v655
  %v657 = vmul.f32 %v634, 1.442695
  %v658 = vpow.pop %v657
  %v659 = vmul.f32 %v635, 1.442695
  %v660 = vpow.pop %v659
  %v661 = vmul.f32 %v636, 1.442695
  %v662 = vpow.pop %v661
  %v663 = vmul.f32 %v637, 1.442695
  %v664 = vpow.pop %v663
  %v665 = vmul.f32 %v638, 1.442695
  %v666 = vpow.pop %v665
  %v667 = vmul.f32 %v639, 1.442695
  %v668 = vpow.pop %v667
  %v669 = vmul.f32 %v640, 1.442695
  %v670 = vpow.pop %v669
  %v671 = vmul.f32 %v641, 1.442695
  %v672 = vpow.pop %v671
  %v673 = vmul.f32 %v642, 1.442695
  %v674 = vpow.pop %v673
  %v675 = vpack.c.bf16 %v644, %v644
  %v676 = vpack.c.bf16 %v646, %v646
  %v677 = vpack.c.bf16 %v648, %v648
  %v678 = vpack.c.bf16 %v650, %v650
  %v679 = vpack.c.bf16 %v652, %v652
  %v680 = vpack.c.bf16 %v654, %v654
  %v681 = vpack.c.bf16 %v656, %v656
  %v682 = vpack.c.bf16 %v658, %v658
  %v683 = vpack.c.bf16 %v660, %v660
  %v684 = vpack.c.bf16 %v662, %v662
  %v685 = vpack.c.bf16 %v664, %v664
  %v686 = vpack.c.bf16 %v666, %v666
  %v687 = vpack.c.bf16 %v668, %v668
  %v688 = vpack.c.bf16 %v670, %v670
  %v689 = vpack.c.bf16 %v672, %v672
  %v690 = vpack.c.bf16 %v674, %v674
  %v707 = vunpack.c.l.b16 %v434
  %v708 = vunpack.c.l.b16 %v435
  %v709 = vunpack.c.l.b16 %v436
  %v710 = vunpack.c.l.b16 %v437
  %v711 = vunpack.c.l.b16 %v438
  %v712 = vunpack.c.l.b16 %v439
  %v713 = vunpack.c.l.b16 %v440
  %v714 = vunpack.c.l.b16 %v441
  %v715 = vunpack.c.l.b16 %v442
  %v716 = vunpack.c.l.b16 %v443
  %v717 = vunpack.c.l.b16 %v444
  %v718 = vunpack.c.l.b16 %v445
  %v719 = vunpack.c.l.b16 %v446
  %v720 = vunpack.c.l.b16 %v447
  %v721 = vunpack.c.l.b16 %v448
  %v722 = vunpack.c.l.b16 %v449
  %v723 = vpack.c.b16 %v708, %v707
  %v724 = vpack.c.b16 %v710, %v709
  %v725 = vpack.c.b16 %v712, %v711
  %v726 = vpack.c.b16 %v714, %v713
  %v727 = vpack.c.b16 %v716, %v715
  %v728 = vpack.c.b16 %v718, %v717
  %v729 = vpack.c.b16 %v720, %v719
  %v730 = vpack.c.b16 %v722, %v721
  %v755 = vunpack.c.l.b16 %v675
  %v756 = vunpack.c.l.b16 %v676
  %v757 = vunpack.c.l.b16 %v677
  %v758 = vunpack.c.l.b16 %v678
  %v759 = vunpack.c.l.b16 %v679
  %v760 = vunpack.c.l.b16 %v680
  %v761 = vunpack.c.l.b16 %v681
  %v762 = vunpack.c.l.b16 %v682
  %v763 = vunpack.c.l.b16 %v683
  %v764 = vunpack.c.l.b16 %v684
  %v765 = vunpack.c.l.b16 %v685
  %v766 = vunpack.c.l.b16 %v686
  %v767 = vunpack.c.l.b16 %v687
  %v768 = vunpack.c.l.b16 %v688
  %v769 = vunpack.c.l.b16 %v689
  %v770 = vunpack.c.l.b16 %v690
  %v771 = vpack.c.b16 %v756, %v755
  %v772 = vpack.c.b16 %v758, %v757
  %v773 = vpack.c.b16 %v760, %v759
  %v774 = vpack.c.b16 %v762, %v761
  %v775 = vpack.c.b16 %v764, %v763
  %v776 = vpack.c.b16 %v766, %v765
  %v777 = vpack.c.b16 %v768, %v767
  %v778 = vpack.c.b16 %v770, %v769
  %787 = vmatpush.bf16.msra.mxu0 %v159
  %788 = vmatpush.bf16.msra.mxu0 %v158
  %789 = vmatpush.bf16.msra.mxu0 %v157
  %790 = vmatpush.bf16.msra.mxu0 %v156
  %791 = vmatpush.bf16.msra.mxu0 %v155
  %792 = vmatpush.bf16.msra.mxu0 %v154
  %793 = vmatpush.bf16.msra.mxu0 %v153
  %794 = vmatpush.bf16.msra.mxu0 %v152
  %795 = vmatmul.bf16.gmra.mxu0 %v723
  %v796 = vpop.f32.mrf.mxu0
  %v797 = vadd.f32 0.0, %v796
  %v798 = vpop.f32.mrf.mxu0
  %v799 = vadd.f32 0.0, %v798
  %800 = vmatmul.bf16.gmra.mxu0 %v724
  %v801 = vpop.f32.mrf.mxu0
  %v802 = vadd.f32 0.0, %v801
  %v803 = vpop.f32.mrf.mxu0
  %v804 = vadd.f32 0.0, %v803
  %805 = vmatmul.bf16.gmra.mxu0 %v725
  %v806 = vpop.f32.mrf.mxu0
  %v807 = vadd.f32 0.0, %v806
  %v808 = vpop.f32.mrf.mxu0
  %v809 = vadd.f32 0.0, %v808
  %810 = vmatmul.bf16.gmra.mxu0 %v726
  %v811 = vpop.f32.mrf.mxu0
  %v812 = vadd.f32 0.0, %v811
  %v813 = vpop.f32.mrf.mxu0
  %v814 = vadd.f32 0.0, %v813
  %815 = vmatmul.bf16.gmra.mxu0 %v727
  %v816 = vpop.f32.mrf.mxu0
  %v817 = vadd.f32 0.0, %v816
  %v818 = vpop.f32.mrf.mxu0
  %v819 = vadd.f32 0.0, %v818
  %820 = vmatmul.bf16.gmra.mxu0 %v728
  %v821 = vpop.f32.mrf.mxu0
  %v822 = vadd.f32 0.0, %v821
  %v823 = vpop.f32.mrf.mxu0
  %v824 = vadd.f32 0.0, %v823
  %825 = vmatmul.bf16.gmra.mxu0 %v729
  %v826 = vpop.f32.mrf.mxu0
  %v827 = vadd.f32 0.0, %v826
  %v828 = vpop.f32.mrf.mxu0
  %v829 = vadd.f32 0.0, %v828
  %830 = vmatmul.bf16.gmra.mxu0 %v730
  %v831 = vpop.f32.mrf.mxu0
  %v832 = vadd.f32 0.0, %v831
  %v833 = vpop.f32.mrf.mxu0
  %v834 = vadd.f32 0.0, %v833
  %835 = vmatmul.bf16.gmra.mxu0 %v771
  %v836 = vpop.f32.mrf.mxu0
  %v837 = vadd.f32 0.0, %v836
  %v838 = vpop.f32.mrf.mxu0
  %v839 = vadd.f32 0.0, %v838
  %840 = vmatmul.bf16.gmra.mxu0 %v772
  %v841 = vpop.f32.mrf.mxu0
  %v842 = vadd.f32 0.0, %v841
  %v843 = vpop.f32.mrf.mxu0
  %v844 = vadd.f32 0.0, %v843
  %845 = vmatmul.bf16.gmra.mxu0 %v773
  %v846 = vpop.f32.mrf.mxu0
  %v847 = vadd.f32 0.0, %v846
  %v848 = vpop.f32.mrf.mxu0
  %v849 = vadd.f32 0.0, %v848
  %850 = vmatmul.bf16.gmra.mxu0 %v774
  %v851 = vpop.f32.mrf.mxu0
  %v852 = vadd.f32 0.0, %v851
  %v853 = vpop.f32.mrf.mxu0
  %v854 = vadd.f32 0.0, %v853
  %855 = vmatmul.bf16.gmra.mxu0 %v775
  %v856 = vpop.f32.mrf.mxu0
  %v857 = vadd.f32 0.0, %v856
  %v858 = vpop.f32.mrf.mxu0
  %v859 = vadd.f32 0.0, %v858
  %860 = vmatmul.bf16.gmra.mxu0 %v776
  %v861 = vpop.f32.mrf.mxu0
  %v862 = vadd.f32 0.0, %v861
  %v863 = vpop.f32.mrf.mxu0
  %v864 = vadd.f32 0.0, %v863
  %865 = vmatmul.bf16.gmra.mxu0 %v777
  %v866 = vpop.f32.mrf.mxu0
  %v867 = vadd.f32 0.0, %v866
  %v868 = vpop.f32.mrf.mxu0
  %v869 = vadd.f32 0.0, %v868
  %870 = vmatmul.bf16.gmra.mxu0 %v778
  %v871 = vpop.f32.mrf.mxu0
  %v872 = vadd.f32 0.0, %v871
  %v873 = vpop.f32.mrf.mxu0
  %v874 = vadd.f32 0.0, %v873
  %875 = vdwg.mxu0
  %v876 = vrcp.pop %v797
  %v877 = vrcp.pop %v799
  %v878 = vrcp.pop %v802
  %v879 = vrcp.pop %v804
  %v880 = vrcp.pop %v807
  %v881 = vrcp.pop %v809
  %v882 = vrcp.pop %v812
  %v883 = vrcp.pop %v814
  %v884 = vrcp.pop %v817
  %v885 = vrcp.pop %v819
  %v886 = vrcp.pop %v822
  %v887 = vrcp.pop %v824
  %v888 = vrcp.pop %v827
  %v889 = vrcp.pop %v829
  %v890 = vrcp.pop %v832
  %v891 = vrcp.pop %v834
  %v892 = vrcp.pop %v837
  %v893 = vrcp.pop %v839
  %v894 = vrcp.pop %v842
  %v895 = vrcp.pop %v844
  %v896 = vrcp.pop %v847
  %v897 = vrcp.pop %v849
  %v898 = vrcp.pop %v852
  %v899 = vrcp.pop %v854
  %v900 = vrcp.pop %v857
  %v901 = vrcp.pop %v859
  %v902 = vrcp.pop %v862
  %v903 = vrcp.pop %v864
  %v904 = vrcp.pop %v867
  %v905 = vrcp.pop %v869
  %v906 = vrcp.pop %v872
  %v907 = vrcp.pop %v874
  %v908 = vlaneseq
  %v909 = vand.u32 %v908, 127
  %911 = vset.pattern.permute.xlu0 64
  %912 = vperm.xlu0 %911, %v876
  %v913 = vpop.permute.xlu0 %912
  %916 = vset.pattern.permute.xlu0 64
  %917 = vperm.xlu0 %916, %v877
  %v918 = vpop.permute.xlu0 %917
  %921 = vset.pattern.permute.xlu0 64
  %922 = vperm.xlu0 %921, %v878
  %v923 = vpop.permute.xlu0 %922
  %926 = vset.pattern.permute.xlu0 64
  %927 = vperm.xlu0 %926, %v879
  %v928 = vpop.permute.xlu0 %927
  %931 = vset.pattern.permute.xlu0 64
  %932 = vperm.xlu0 %931, %v880
  %v933 = vpop.permute.xlu0 %932
  %936 = vset.pattern.permute.xlu0 64
  %937 = vperm.xlu0 %936, %v881
  %v938 = vpop.permute.xlu0 %937
  %941 = vset.pattern.permute.xlu0 64
  %942 = vperm.xlu0 %941, %v882
  %v943 = vpop.permute.xlu0 %942
  %946 = vset.pattern.permute.xlu0 64
  %947 = vperm.xlu0 %946, %v883
  %v948 = vpop.permute.xlu0 %947
  %951 = vset.pattern.permute.xlu0 64
  %952 = vperm.xlu0 %951, %v884
  %v953 = vpop.permute.xlu0 %952
  %956 = vset.pattern.permute.xlu0 64
  %957 = vperm.xlu0 %956, %v885
  %v958 = vpop.permute.xlu0 %957
  %961 = vset.pattern.permute.xlu0 64
  %962 = vperm.xlu0 %961, %v886
  %v963 = vpop.permute.xlu0 %962
  %966 = vset.pattern.permute.xlu0 64
  %967 = vperm.xlu0 %966, %v887
  %v968 = vpop.permute.xlu0 %967
  %971 = vset.pattern.permute.xlu0 64
  %972 = vperm.xlu0 %971, %v888
  %v973 = vpop.permute.xlu0 %972
  %976 = vset.pattern.permute.xlu0 64
  %977 = vperm.xlu0 %976, %v889
  %v978 = vpop.permute.xlu0 %977
  %981 = vset.pattern.permute.xlu0 64
  %982 = vperm.xlu0 %981, %v890
  %v983 = vpop.permute.xlu0 %982
  %986 = vset.pattern.permute.xlu0 64
  %987 = vperm.xlu0 %986, %v891
  %v988 = vpop.permute.xlu0 %987
  %v990 = vmul.f32 %v797, %v913
  %v991 = vmul.f32 %v799, %v918
  %v992 = vmul.f32 %v802, %v923
  %v993 = vmul.f32 %v804, %v928
  %v994 = vmul.f32 %v807, %v933
  %v995 = vmul.f32 %v809, %v938
  %v996 = vmul.f32 %v812, %v943
  %v997 = vmul.f32 %v814, %v948
  %v998 = vmul.f32 %v817, %v953
  %v999 = vmul.f32 %v819, %v958
  %v1000 = vmul.f32 %v822, %v963
  %v1001 = vmul.f32 %v824, %v968
  %v1002 = vmul.f32 %v827, %v973
  %v1003 = vmul.f32 %v829, %v978
  %v1004 = vmul.f32 %v832, %v983
  %v1005 = vmul.f32 %v834, %v988
  %vm1006 = vcmp.ge.s32.totalorder %v909, 16
  %1008 = vset.pattern.permute.xlu0 64
  %1009 = vperm.xlu0 %1008, %v892
  %v1010 = vpop.permute.xlu0 %1009
  %1013 = vset.pattern.permute.xlu0 64
  %1014 = vperm.xlu0 %1013, %v893
  %v1015 = vpop.permute.xlu0 %1014
  %1018 = vset.pattern.permute.xlu0 64
  %1019 = vperm.xlu0 %1018, %v894
  %v1020 = vpop.permute.xlu0 %1019
  %1023 = vset.pattern.permute.xlu0 64
  %1024 = vperm.xlu0 %1023, %v895
  %v1025 = vpop.permute.xlu0 %1024
  %1028 = vset.pattern.permute.xlu0 64
  %1029 = vperm.xlu0 %1028, %v896
  %v1030 = vpop.permute.xlu0 %1029
  %1033 = vset.pattern.permute.xlu0 64
  %1034 = vperm.xlu0 %1033, %v897
  %v1035 = vpop.permute.xlu0 %1034
  %1038 = vset.pattern.permute.xlu0 64
  %1039 = vperm.xlu0 %1038, %v898
  %v1040 = vpop.permute.xlu0 %1039
  %1043 = vset.pattern.permute.xlu0 64
  %1044 = vperm.xlu0 %1043, %v899
  %v1045 = vpop.permute.xlu0 %1044
  %1048 = vset.pattern.permute.xlu0 64
  %1049 = vperm.xlu0 %1048, %v900
  %v1050 = vpop.permute.xlu0 %1049
  %1053 = vset.pattern.permute.xlu0 64
  %1054 = vperm.xlu0 %1053, %v901
  %v1055 = vpop.permute.xlu0 %1054
  %1058 = vset.pattern.permute.xlu0 64
  %1059 = vperm.xlu0 %1058, %v902
  %v1060 = vpop.permute.xlu0 %1059
  %1063 = vset.pattern.permute.xlu0 64
  %1064 = vperm.xlu0 %1063, %v903
  %v1065 = vpop.permute.xlu0 %1064
  %1068 = vset.pattern.permute.xlu0 64
  %1069 = vperm.xlu0 %1068, %v904
  %v1070 = vpop.permute.xlu0 %1069
  %1073 = vset.pattern.permute.xlu0 64
  %1074 = vperm.xlu0 %1073, %v905
  %v1075 = vpop.permute.xlu0 %1074
  %1078 = vset.pattern.permute.xlu0 64
  %1079 = vperm.xlu0 %1078, %v906
  %v1080 = vpop.permute.xlu0 %1079
  %1083 = vset.pattern.permute.xlu0 64
  %1084 = vperm.xlu0 %1083, %v907
  %v1085 = vpop.permute.xlu0 %1084
  %v1087 = vmul.f32 %v837, %v1010
  %v1088 = vmul.f32 %v839, %v1015
  %v1089 = vmul.f32 %v842, %v1020
  %v1090 = vmul.f32 %v844, %v1025
  %v1091 = vmul.f32 %v847, %v1030
  %v1092 = vmul.f32 %v849, %v1035
  %v1093 = vmul.f32 %v852, %v1040
  %v1094 = vmul.f32 %v854, %v1045
  %v1095 = vmul.f32 %v857, %v1050
  %v1096 = vmul.f32 %v859, %v1055
  %v1097 = vmul.f32 %v862, %v1060
  %v1098 = vmul.f32 %v864, %v1065
  %v1099 = vmul.f32 %v867, %v1070
  %v1100 = vmul.f32 %v869, %v1075
  %v1101 = vmul.f32 %v872, %v1080
  %v1102 = vmul.f32 %v874, %v1085
  %v1103 = vsel %vm1006, %v1087, %v990
  %v1104 = vsel %vm1006, %v1088, %v991
  %v1105 = vsel %vm1006, %v1089, %v992
  %v1106 = vsel %vm1006, %v1090, %v993
  %v1107 = vsel %vm1006, %v1091, %v994
  %v1108 = vsel %vm1006, %v1092, %v995
  %v1109 = vsel %vm1006, %v1093, %v996
  %v1110 = vsel %vm1006, %v1094, %v997
  %v1111 = vsel %vm1006, %v1095, %v998
  %v1112 = vsel %vm1006, %v1096, %v999
  %v1113 = vsel %vm1006, %v1097, %v1000
  %v1114 = vsel %vm1006, %v1098, %v1001
  %v1115 = vsel %vm1006, %v1099, %v1002
  %v1116 = vsel %vm1006, %v1100, %v1003
  %v1117 = vsel %vm1006, %v1101, %v1004
  %v1118 = vsel %vm1006, %v1102, %v1005
  %1119 = vrot.lane.b32.xlu0 %v105, 96
  %v1120 = vpop.permute.xlu0 %1119
  %1121 = vrot.lane.b32.xlu0 %v108, 96
  %v1122 = vpop.permute.xlu0 %1121
  %1123 = vrot.lane.b32.xlu0 %v111, 96
  %v1124 = vpop.permute.xlu0 %1123
  %1125 = vrot.lane.b32.xlu0 %v114, 96
  %v1126 = vpop.permute.xlu0 %1125
  %1127 = vrot.lane.b32.xlu0 %v117, 96
  %v1128 = vpop.permute.xlu0 %1127
  %1129 = vrot.lane.b32.xlu0 %v120, 96
  %v1130 = vpop.permute.xlu0 %1129
  %1131 = vrot.lane.b32.xlu0 %v123, 96
  %v1132 = vpop.permute.xlu0 %1131
  %1133 = vrot.lane.b32.xlu0 %v126, 96
  %v1134 = vpop.permute.xlu0 %1133
  %1135 = vrot.lane.b32.xlu0 %v129, 96
  %v1136 = vpop.permute.xlu0 %1135
  %1137 = vrot.lane.b32.xlu0 %v132, 96
  %v1138 = vpop.permute.xlu0 %1137
  %1139 = vrot.lane.b32.xlu0 %v135, 96
  %v1140 = vpop.permute.xlu0 %1139
  %1141 = vrot.lane.b32.xlu0 %v138, 96
  %v1142 = vpop.permute.xlu0 %1141
  %1143 = vrot.lane.b32.xlu0 %v141, 96
  %v1144 = vpop.permute.xlu0 %1143
  %1145 = vrot.lane.b32.xlu0 %v144, 96
  %v1146 = vpop.permute.xlu0 %1145
  %1147 = vrot.lane.b32.xlu0 %v147, 96
  %v1148 = vpop.permute.xlu0 %1147
  %1149 = vrot.lane.b32.xlu0 %v150, 96
  %v1150 = vpop.permute.xlu0 %1149
  %v1167 = vadd.f32 %v1103, %v1120
  %v1168 = vadd.f32 %v1104, %v1122
  %v1169 = vadd.f32 %v1105, %v1124
  %v1170 = vadd.f32 %v1106, %v1126
  %v1171 = vadd.f32 %v1107, %v1128
  %v1172 = vadd.f32 %v1108, %v1130
  %v1173 = vadd.f32 %v1109, %v1132
  %v1174 = vadd.f32 %v1110, %v1134
  %v1175 = vadd.f32 %v1111, %v1136
  %v1176 = vadd.f32 %v1112, %v1138
  %v1177 = vadd.f32 %v1113, %v1140
  %v1178 = vadd.f32 %v1114, %v1142
  %v1179 = vadd.f32 %v1115, %v1144
  %v1180 = vadd.f32 %v1116, %v1146
  %v1181 = vadd.f32 %v1117, %v1148
  %v1182 = vadd.f32 %v1118, %v1150
  %vm1183 = vcmask 261120
  %1184 = vst.msk [vmem:[%s4] sm:$0xff] %vm1183, %v1167
  %1185 = vst.msk [vmem:[%s4 + $0x8] sm:$0xff] %vm1183, %v1168
  %1186 = vst.msk [vmem:[%s4 + $0x10] sm:$0xff] %vm1183, %v1169
  %1187 = vst.msk [vmem:[%s4 + $0x18] sm:$0xff] %vm1183, %v1170
  %1188 = vst.msk [vmem:[%s4 + $0x20] sm:$0xff] %vm1183, %v1171
  %1189 = vst.msk [vmem:[%s4 + $0x28] sm:$0xff] %vm1183, %v1172
  %1190 = vst.msk [vmem:[%s4 + $0x30] sm:$0xff] %vm1183, %v1173
  %1191 = vst.msk [vmem:[%s4 + $0x38] sm:$0xff] %vm1183, %v1174
  %1192 = vst.msk [vmem:[%s4 + $0x40] sm:$0xff] %vm1183, %v1175
  %1193 = vst.msk [vmem:[%s4 + $0x48] sm:$0xff] %vm1183, %v1176
  %1194 = vst.msk [vmem:[%s4 + $0x50] sm:$0xff] %vm1183, %v1177
  %1195 = vst.msk [vmem:[%s4 + $0x58] sm:$0xff] %vm1183, %v1178
  %1196 = vst.msk [vmem:[%s4 + $0x60] sm:$0xff] %vm1183, %v1179
  %1197 = vst.msk [vmem:[%s4 + $0x68] sm:$0xff] %vm1183, %v1180
  %1198 = vst.msk [vmem:[%s4 + $0x70] sm:$0xff] %vm1183, %v1181
  %1199 = vst.msk [vmem:[%s4 + $0x78] sm:$0xff] %vm1183, %v1182
  // Predicated region
  $region18: #{tpu_custom_call.1} parent=0 // pred_check
    _
  $region19: #{tpu_custom_call.1} parent=0 // pred_check_branch
    %1201 = sbr.rel (0) target = $region21
  $region20: #{tpu_custom_call.1} parent=0 // pred_region
    _
  $region21: #{tpu_custom_call.1} parent=0 // pred_fallthru
    _
  // Predicated region
  $region22: #{tpu_custom_call.1} parent=0 // pred_check
    _
  $region23: #{tpu_custom_call.1} parent=0 // pred_check_branch
    %1203 = sbr.rel (0) target = $region25
  $region24: #{tpu_custom_call.1} parent=0 // pred_region
    _
  $region25: #{tpu_custom_call.1} parent=0 // pred_fallthru
    _

</llo_original>
